<compile_context>
chip_gen: v7x
topology: tpu7x:2x2x1
jax: 0.10.0
libtpu: 0.0.40
codegen_flags: <defaults>
</compile_context>

<pallas_src>
import jax
import jax.numpy as jnp
from jax.experimental import pallas as pl
from jax.experimental.pallas import tpu as pltpu


def _round_up(x, m):
    return ((x + m - 1) // m) * m


def _sublane(dtype):
    itemsize = jnp.dtype(dtype).itemsize
    if itemsize >= 4:
        return 8
    if itemsize == 2:
        return 16
    return 32


def _vmem_capacity_bytes():
    try:
        return int(pltpu.get_tpu_info().vmem_capacity_bytes)
    except Exception:
        return 64 * 1024 * 1024  # conservative: v7x per-TC VMEM


def _pick_tn(vocab, tn_target):
    """Pick a lane-dense vocab tile; prefer one that avoids padding w_out."""
    tn_target = max(128, (tn_target // 128) * 128)
    if vocab <= tn_target:
        return vocab, vocab                  # single full-extent vocab block, no pad
    if vocab % 128 == 0:
        cand = tn_target
        while cand >= 128:
            if vocab % cand == 0:
                return cand, vocab           # TN divides vocab -> no per-call pad copy
            cand -= 128
    # TODO(synk): for vocabs that are not a multiple of 128, hoist this pad to
    # weight-load time so the (bottleneck, vocab) copy is not paid per forward.
    return tn_target, _round_up(vocab, tn_target)


def _factorized_embedding_kernel(x_ref, w_dense_ref, w_out_ref, o_ref, h_ref):
    # Bottleneck projection: computed once per M tile (vocab axis is the inner
    # grid axis).  f32 accumulate, stored once in w_out's dtype so the second
    # matmul reads it with no per-vocab-step cast.
    @pl.when(pl.program_id(1) == 0)
    def _():
        h_ref[...] = jnp.dot(
            x_ref[...], w_dense_ref[...], preferred_element_type=jnp.float32
        ).astype(h_ref.dtype)

    # Vocab projection for this (M tile, vocab tile); lane-dense output store.
    o_ref[...] = jnp.dot(
        h_ref[...], w_out_ref[...], preferred_element_type=jnp.float32
    ).astype(o_ref.dtype)


def _vocab_proj_kernel(h_ref, w_out_ref, o_ref):
    # Small-M (decode) path: h precomputed, vocab tiles split across cores.
    o_ref[...] = jnp.dot(
        h_ref[...], w_out_ref[...], preferred_element_type=jnp.float32
    ).astype(o_ref.dtype)


def factorized_embedding(x, w_dense, w_out, *, tm=1024, tn=1024):
    """x: (batch, seq, hidden); w_dense: (hidden, bottleneck); w_out: (bottleneck, vocab)."""
    batch, seq, hidden = x.shape
    bottleneck = w_dense.shape[1]
    vocab = w_out.shape[1]
    M = batch * seq
    x2d = x.reshape(M, hidden)

    x_is = jnp.dtype(x.dtype).itemsize
    wd_is = jnp.dtype(w_dense.dtype).itemsize
    wo_is = jnp.dtype(w_out.dtype).itemsize
    out_is = x_is

    sub = _sublane(x.dtype)
    cap = _vmem_capacity_bytes()
    budget = int(cap * 0.80)  # headroom for compiler-internal scratch / semaphores

    # ---- M tile: as large as VMEM allows. Arithmetic intensity on the w_out
    # stream is ~TM FLOP/byte, so TM decides whether we are MXU-bound or
    # w_out-bandwidth-bound on v5e/v6e/v7x.
    TM = min(_round_up(tm, sub), _round_up(M, sub))

    def _fixed_bytes(tm_):
        # x tiles (double-buffered) + w_dense (budgeted at 2 buffers so the
        # non-Buffered(1) fallback also fits) + h scratch (w_out dtype).
        return (2 * tm_ * hidden * x_is
                + 2 * hidden * bottleneck * wd_is
                + tm_ * bottleneck * wo_is)

    def _per_tn_bytes(tm_):
        # w_out tile + output tile, both double-buffered, per lane of TN.
        return 2 * bottleneck * wo_is + 2 * tm_ * out_is

    while TM > sub and _fixed_bytes(TM) + 128 * _per_tn_bytes(TM) > budget:
        TM = max(sub, _round_up(TM // 2, sub))

    # ---- vocab tile: lane-dense, sized from remaining VMEM, preferring a tile
    # that divides vocab so w_out never needs a per-call pad copy.
    tn_cap = max(128, (budget - _fixed_bytes(TM)) // max(_per_tn_bytes(TM), 1))
    TN, v_pad = _pick_tn(vocab, min(tn, int(tn_cap)))
    w_out_p = w_out if v_pad == vocab else jnp.pad(w_out, ((0, 0), (0, v_pad - vocab)))

    vmem_est = _fixed_bytes(TM) + TN * _per_tn_bytes(TM)
    vmem_limit = int(min(0.9 * cap, max(1.5 * vmem_est, 32 * 1024 * 1024)))

    m_tiles = pl.cdiv(M, TM)

    # ---------------- small-M (decode) path: single M tile ----------------
    if m_tiles == 1:
        # A single M tile with a "parallel" M axis would pin all work to one
        # TensorCore on v7x.  Precompute the tiny bottleneck projection and let
        # the vocab axis be the parallel grid dimension instead.
        h = jnp.dot(x2d, w_dense, preferred_element_type=jnp.float32).astype(w_out.dtype)
        cost = pl.CostEstimate(
            flops=int(2 * M * hidden * bottleneck + 2 * M * bottleneck * v_pad),
            transcendentals=0,
            bytes_accessed=int(M * bottleneck * wo_is
                               + bottleneck * v_pad * wo_is
                               + M * v_pad * out_is),
        )
        out2d = pl.pallas_call(
            _vocab_proj_kernel,
            out_shape=jax.ShapeDtypeStruct((M, v_pad), x.dtype),
            grid=(v_pad // TN,),
            in_specs=[
                pl.BlockSpec((M, bottleneck), lambda j: (0, 0)),   # resident
                pl.BlockSpec((bottleneck, TN), lambda j: (0, j)),
            ],
            out_specs=pl.BlockSpec((M, TN), lambda j: (0, j)),
            compiler_params=pltpu.CompilerParams(
                dimension_semantics=("parallel",),
                vmem_limit_bytes=vmem_limit,
            ),
            cost_estimate=cost,
        )(h, w_out_p)
        return out2d[:, :vocab].reshape(batch, seq, vocab)

    # ---------------- fused 2-D path: (M tiles x vocab tiles) ----------------
    m_pad = m_tiles * TM
    if m_pad != M:
        x2d = jnp.pad(x2d, ((0, m_pad - M), (0, 0)))

    grid = (m_tiles, v_pad // TN)
    cost = pl.CostEstimate(
        flops=int(2 * M * hidden * bottleneck + 2 * M * bottleneck * vocab),
        transcendentals=0,
        bytes_accessed=int(
            m_pad * hidden * x_is
            + hidden * bottleneck * wd_is
            + m_tiles * bottleneck * v_pad * wo_is   # w_out re-streamed per M tile
            + m_pad * v_pad * out_is
        ),
    )

    def _build(single_buffer_w_dense):
        if single_buffer_w_dense:
            # w_dense's block index never changes; a second pipeline buffer is
            # pure VMEM waste — single-buffer it and spend the VMEM on TM/TN.
            w_dense_spec = pl.BlockSpec(
                (hidden, bottleneck), lambda i, j: (0, 0),
                pipeline_mode=pl.Buffered(1))
        else:
            w_dense_spec = pl.BlockSpec((hidden, bottleneck), lambda i, j: (0, 0))
        return pl.pallas_call(
            _factorized_embedding_kernel,
            out_shape=jax.ShapeDtypeStruct((m_pad, v_pad), x.dtype),
            grid=grid,
            in_specs=[
                pl.BlockSpec((TM, hidden), lambda i, j: (i, 0)),
                w_dense_spec,
                pl.BlockSpec((bottleneck, TN), lambda i, j: (0, j)),
            ],
            out_specs=pl.BlockSpec((TM, TN), lambda i, j: (i, j)),
            scratch_shapes=[pltpu.VMEM((TM, bottleneck), w_out.dtype)],
            compiler_params=pltpu.CompilerParams(
                # M tiles are independent (megacore-parallel on v7x); the vocab
                # axis carries the h scratch so it stays "arbitrary" (inner).
                dimension_semantics=("parallel", "arbitrary"),
                vmem_limit_bytes=vmem_limit,
            ),
            cost_estimate=cost,
        )

    try:
        out2d = jax.block_until_ready(_build(True)(x2d, w_dense, w_out_p))
    except Exception:
        # pipeline_mode=pl.Buffered(1) not supported by this jax version:
        # fall back to the default (still resident) double-buffered w_dense.
        out2d = jax.block_until_ready(_build(False)(x2d, w_dense, w_out_p))

    return out2d[:M, :vocab].reshape(batch, seq, vocab)


if __name__ == "__main__":
    key = jax.random.PRNGKey(0)
    k_small, k_big = jax.random.split(key)

    def _init(k, batch, seq, hidden, bottleneck, vocab):
        kx, k1, k2 = jax.random.split(k, 3)
        x = jax.random.normal(kx, (batch, seq, hidden), dtype=jnp.float32)
        b1 = 1.0 / (hidden ** 0.5)
        b2 = 1.0 / (bottleneck ** 0.5)
        # dense.weight: (bottleneck, hidden)  -> stored transposed (hidden, bottleneck)
        w_dense = jax.random.uniform(k1, (hidden, bottleneck),
                                     minval=-b1, maxval=b1, dtype=jnp.float32)
        # out_proj.weight: (vocab, bottleneck) -> stored transposed (bottleneck, vocab)
        w_out = jax.random.uniform(k2, (bottleneck, vocab),
                                   minval=-b2, maxval=b2, dtype=jnp.float32)
        return x, w_dense, w_out

    # 1) Small decode-style shapes (single M tile -> vocab-parallel path).
    batch, seq, hidden, bottleneck, vocab = 2, 8, 32, 16, 64
    x, w_dense, w_out = _init(k_small, batch, seq, hidden, bottleneck, vocab)
    out = jax.block_until_ready(factorized_embedding(x, w_dense, w_out))
    ref = (x.reshape(-1, hidden) @ w_dense @ w_out).reshape(batch, seq, vocab)
    assert out.shape == (batch, seq, vocab)
    assert jnp.allclose(out, ref, atol=2e-2, rtol=2e-2), float(jnp.max(jnp.abs(out - ref)))

    # 2) Larger M so the fused 2-D (M tiles x vocab tiles) kernel also runs.
    batch, seq, hidden, bottleneck, vocab = 2, 512, 128, 64, 256
    x, w_dense, w_out = _init(k_big, batch, seq, hidden, bottleneck, vocab)
    out = jax.block_until_ready(factorized_embedding(x, w_dense, w_out, tm=512, tn=128))
    ref = (x.reshape(-1, hidden) @ w_dense @ w_out).reshape(batch, seq, vocab)
    assert out.shape == (batch, seq, vocab)
    assert jnp.allclose(out, ref, atol=2e-2, rtol=2e-2), float(jnp.max(jnp.abs(out - ref)))

    print("KERNEL_OK")
</pallas_src>

<mosaic_0001>
module attributes {stable_mosaic.version = 11 : i64} {
  func.func @_vocab_proj_kernel(%arg0: i32, %arg1: memref<16x16xf32, #tpu.memory_space<vmem>>, %arg2: memref<16x64xf32, #tpu.memory_space<vmem>>, %arg3: memref<16x64xf32, #tpu.memory_space<vmem>>) attributes {dimension_semantics = [#tpu.dimension_semantics<parallel>], iteration_bounds = array<i64: 1>, scalar_prefetch = 0 : i64, scratch_operands = 0 : i64, tpu.core_type = #tpu.core_type<tc>, window_params = [{pipeline_mode = #tpu.pipeline_mode<synchronous>, transform_indices = @transform_0, window_bounds = array<i64: 16, 16>}, {transform_indices = @transform_1, window_bounds = array<i64: 16, 64>}, {transform_indices = @transform_2, window_bounds = array<i64: 16, 64>}]} {
    %c0 = arith.constant 0 : index
    %c0_0 = arith.constant 0 : index
    %0 = vector.load %arg1[%c0, %c0_0] : memref<16x16xf32, #tpu.memory_space<vmem>>, vector<16x16xf32>
    %c0_1 = arith.constant 0 : index
    %c0_2 = arith.constant 0 : index
    %1 = vector.load %arg2[%c0_1, %c0_2] : memref<16x64xf32, #tpu.memory_space<vmem>>, vector<16x64xf32>
    %cst = arith.constant dense<0.000000e+00> : vector<16x64xf32>
    %2 = tpu.matmul %0, %1, %cst {dimension_numbers = #tpu.dot_dimension_numbers<[1], [0], [0], [1], [0, 0, 1, 1], [], []>} : vector<16x16xf32>, vector<16x64xf32>, vector<16x64xf32> -> vector<16x64xf32>
    %c0_3 = arith.constant 0 : index
    %c0_4 = arith.constant 0 : index
    %3 = vector.load %arg3[%c0_3, %c0_4] : memref<16x64xf32, #tpu.memory_space<vmem>>, vector<16x64xf32>
    tpu.vector_store %arg3[%c0_3, %c0_4], %2 {strides = array<i32>} : memref<16x64xf32, #tpu.memory_space<vmem>>, vector<16x64xf32>,
    return
  }
  func.func @transform_0(%arg0: i32) -> (i32, i32) {
    %c0_i32 = arith.constant 0 : i32
    %c0_i32_0 = arith.constant 0 : i32
    %c0_i32_1 = arith.constant 0 : i32
    return %c0_i32, %c0_i32_0 : i32, i32
  }
  func.func @transform_1(%arg0: i32) -> (i32, i32) {
    %c0_i32 = arith.constant 0 : i32
    %c0_i32_0 = arith.constant 0 : i32
    return %c0_i32, %arg0 : i32, i32
  }
  func.func @transform_2(%arg0: i32) -> (i32, i32) {
    %c0_i32 = arith.constant 0 : i32
    %c0_i32_0 = arith.constant 0 : i32
    return %c0_i32, %arg0 : i32, i32
  }
}

</mosaic_0001>

<llo_original>
// kernel: tpu_custom_call.1
$region0: #{tpu_custom_call.1}
  #allocation0 [shape = 'u32[]', space=smem, size = 0x4, offset = 0x4, fixed_abs, tag = 'smem constant byte address 0x4 - core index']
  #allocation1 [shape = 'u32[144,128]{1,0:T(1,128)}', space=vmem, size = 0x12000, scoped, tag = 'internal scratch']
  %s0 = inlined_call_operand.hbm [shape: f32[16,16], index: 0, kind: input, shape index: {}]
  %s1 = inlined_call_operand.hbm [shape: f32[16,64], index: 1, kind: input, shape index: {}]
  %s2 = inlined_call_operand.hbm [shape: f32[16,64], index: 2, kind: output, shape index: {}]
  %s3 = sld [smem:[#allocation0]]
  $region26: #{tpu_custom_call.1} parent=0
    _
  %s5 = ssub.s32 1, %s3
  %s6 = scalar_select 0, %s5, %s3
  $region1: #{tpu_custom_call.1} parent=0
    #allocation2 [shape = 'u8[8192]{0}', space=vmem, size = 0x2000, scoped, tag = 'input window, operand 0, single buffered']
    #allocation3 [shape = 's32[1]{0}', space=sflag, size = 0x4, scoped, tag = 'scoped memory for tpu_custom_call.1']
    #allocation4 [shape = 's32[1]{0}', space=sflag, size = 0x4, scoped, tag = 'scoped memory for tpu_custom_call.1']
    #allocation5 [shape = 'u8[8192]{0}', space=vmem, size = 0x2000, scoped, tag = 'input window, operand 1, single buffered']
    #allocation6 [shape = 's32[1]{0}', space=sflag, size = 0x4, scoped, tag = 'scoped memory for tpu_custom_call.1']
    #allocation7 [shape = 'u8[8192]{0}', space=vmem, size = 0x2000, scoped, tag = 'output window, operand 0, single buffered']
    %7 = vsyncpa [#allocation3], 0
    %8 = vsyncpa [#allocation6], 0
    %9 = vsyncpa [#allocation4], 0
    // Predicated region
    $region2: #{tpu_custom_call.1} parent=1 // pred_check
      _
    $region3: #{tpu_custom_call.1} parent=1 // pred_check_branch
      %11 = sbr.rel (0) target = $region5
    $region4: #{tpu_custom_call.1} parent=1 // pred_region
      %s13 = ssub.s32 256, 256
      %14 = vsyncadd [#allocation3], %s13
      %s15 = sshll.u32 [#allocation2], 4
      %s16 = int_to_ptr.vmem [resolvable:$true] %s15
      %21 = dma.hbm_to_vmem [thread:$0]  %s0, 256, %s16, [#allocation3], 128, 128, 8
    $region5: #{tpu_custom_call.1} parent=1 // pred_fallthru
      _
    // Predicated region
    $region6: #{tpu_custom_call.1} parent=1 // pred_check
      _
    $region7: #{tpu_custom_call.1} parent=1 // pred_check_branch
      %23 = sbr.rel (0) target = $region9
    $region8: #{tpu_custom_call.1} parent=1 // pred_region
      %s25 = ssub.s32 256, 256
      %26 = vsyncadd [#allocation6], %s25
      %s27 = sshll.u32 [#allocation5], 4
      %s28 = int_to_ptr.vmem [resolvable:$true] %s27
      %33 = dma.hbm_to_vmem [thread:$0]  %s1, 256, %s28, [#allocation6], 128, 128, 8
    $region9: #{tpu_custom_call.1} parent=1 // pred_fallthru
      _
    // Predicated region
    $region10: #{tpu_custom_call.1} parent=1 // pred_check
      _
    $region11: #{tpu_custom_call.1} parent=1 // pred_check_branch
      %35 = sbr.rel (0) target = $region13
    $region12: #{tpu_custom_call.1} parent=1 // pred_region
      %36 = dma.done [#allocation3], 256
    $region13: #{tpu_custom_call.1} parent=1 // pred_fallthru
      _
    // Predicated region
    $region14: #{tpu_custom_call.1} parent=1 // pred_check
      _
    $region15: #{tpu_custom_call.1} parent=1 // pred_check_branch
      %38 = sbr.rel (0) target = $region17
    $region16: #{tpu_custom_call.1} parent=1 // pred_region
      %39 = dma.done [#allocation6], 256
    $region17: #{tpu_custom_call.1} parent=1 // pred_fallthru
      _
    %v40 = vld [vmem:[#allocation2] sm:$0xff]
    %v41 = vld [vmem:[#allocation2 + $0x8] sm:$0xff]
    %v42 = vld [vmem:[#allocation5] sm:$0xff]
    %v43 = vld [vmem:[#allocation5 + $0x8] sm:$0xff]
    %vm44 = vcmask 130048
    %v46 = vsel %vm44, %v40, 0
    %v49 = vsel %vm44, %v41, 0
    %51 = vmatprep.subr.mxu0 0.0
    %52 = vmatpush1.msra.mxu0 %v42
    %53 = vmatprep.subr.mxu0 0.0
    %54 = vmatpush1.msra.mxu0 %v43
    %55 = vmatprep.subr.mxu0 0.0
    %56 = vmatpush1.msra.mxu0 0.0
    %57 = vmatprep.subr.mxu0 0.0
    %58 = vmatpush1.msra.mxu0 0.0
    %59 = vmatprep.subr.mxu0 0.0
    %60 = vmatpush1.msra.mxu0 0.0
    %61 = vmatprep.subr.mxu0 0.0
    %62 = vmatpush1.msra.mxu0 0.0
    %63 = vmatprep.subr.mxu0 0.0
    %64 = vmatpush1.msra.mxu0 0.0
    %65 = vmatprep.subr.mxu0 0.0
    %66 = vmatpush1.msra.mxu0 0.0
    %67 = vmatprep.subr.mxu0 0.0
    %68 = vmatpush1.msra.mxu0 0.0
    %69 = vmatprep.subr.mxu0 0.0
    %70 = vmatpush1.msra.mxu0 0.0
    %71 = vmatprep.subr.mxu0 0.0
    %72 = vmatpush1.msra.mxu0 0.0
    %73 = vmatprep.subr.mxu0 0.0
    %74 = vmatpush1.msra.mxu0 0.0
    %75 = vmatprep.subr.mxu0 0.0
    %76 = vmatpush1.msra.mxu0 0.0
    %77 = vmatprep.subr.mxu0 0.0
    %78 = vmatpush1.msra.mxu0 0.0
    %79 = vmatprep.subr.mxu0 0.0
    %80 = vmatpush1.msra.mxu0 0.0
    %81 = vmatprep.subr.mxu0 0.0
    %82 = vmatpush1.msra.mxu0 0.0
    %83 = vmatprep.subr.mxu0 0.0
    %84 = vmatpush1.msra.mxu0 0.0
    %85 = vmatprep.subr.mxu0 0.0
    %86 = vmatpush1.msra.mxu0 0.0
    %87 = vmatprep.subr.mxu0 0.0
    %88 = vmatpush1.msra.mxu0 0.0
    %89 = vmatprep.subr.mxu0 0.0
    %90 = vmatpush1.msra.mxu0 0.0
    %91 = vmatprep.subr.mxu0 0.0
    %92 = vmatpush1.msra.mxu0 0.0
    %93 = vmatprep.subr.mxu0 0.0
    %94 = vmatpush1.msra.mxu0 0.0
    %95 = vmatprep.subr.mxu0 0.0
    %96 = vmatpush1.msra.mxu0 0.0
    %97 = vmatprep.subr.mxu0 0.0
    %98 = vmatpush1.msra.mxu0 0.0
    %99 = vmatprep.subr.mxu0 0.0
    %100 = vmatpush1.msra.mxu0 0.0
    %101 = vmatprep.subr.mxu0 0.0
    %102 = vmatpush1.msra.mxu0 0.0
    %103 = vmatprep.subr.mxu0 0.0
    %104 = vmatpush1.msra.mxu0 0.0
    %105 = vmatprep.subr.mxu0 0.0
    %106 = vmatpush1.msra.mxu0 0.0
    %107 = vmatprep.subr.mxu0 0.0
    %108 = vmatpush1.msra.mxu0 0.0
    %109 = vmatprep.subr.mxu0 0.0
    %110 = vmatpush1.msra.mxu0 0.0
    %111 = vmatprep.subr.mxu0 0.0
    %112 = vmatpush1.msra.mxu0 0.0
    %113 = vmatprep.subr.mxu0 0.0
    %114 = vmatpush1.msra.mxu0 0.0
    %115 = vmatprep.mubr.f32.mxu0 0.0
    %116 = vmatmul.mubr.f32.gmra.mrb[0].mxu0 %v46
    %v117 = vpop.f32.mrb[0].mxu0
    %v118 = vadd.f32 0.0, %v117
    %v119 = vpop.f32.mrb[0].mxu0
    %120 = vmatprep.mubr.f32.mxu0 0.0
    %121 = vmatmul.mubr.f32.gmra.mrb[0].mxu0 %v49
    %v122 = vpop.f32.mrb[0].mxu0
    %v123 = vadd.f32 0.0, %v122
    %v124 = vpop.f32.mrb[0].mxu0
    %125 = vdwg.mxu0
    %vm126 = vcmask 523264
    %127 = vst.msk [vmem:[#allocation7] sm:$0xff] %vm126, %v118
    %128 = vst.msk [vmem:[#allocation7 + $0x8] sm:$0xff] %vm126, %v123
    // Predicated region
    $region18: #{tpu_custom_call.1} parent=1 // pred_check
      _
    $region19: #{tpu_custom_call.1} parent=1 // pred_check_branch
      %130 = sbr.rel (0) target = $region21
    $region20: #{tpu_custom_call.1} parent=1 // pred_region
      %s132 = ssub.s32 256, 256
      %133 = vsyncadd [#allocation4], %s132
      %s134 = sshll.u32 [#allocation7], 4
      %s135 = int_to_ptr.vmem [resolvable:$true] %s134
      %140 = dma.vmem_to_hbm [thread:$0]  %s135, 256, %s2, [#allocation4], 128, 128, 8
    $region21: #{tpu_custom_call.1} parent=1 // pred_fallthru
      _
    // Predicated region
    $region22: #{tpu_custom_call.1} parent=1 // pred_check
      _
    $region23: #{tpu_custom_call.1} parent=1 // pred_check_branch
      %142 = sbr.rel (0) target = $region25
    $region24: #{tpu_custom_call.1} parent=1 // pred_region
      %143 = dma.done [#allocation4], 256
    $region25: #{tpu_custom_call.1} parent=1 // pred_fallthru
      _
    %144 = vsyncpa [#allocation3], 1
    %145 = vsyncpa [#allocation6], 1
    %146 = vsyncpa [#allocation4], 1

</llo_original>
